<compile_context>
chip_gen: v7x
topology: tpu7x:2x2x1
jax: 0.10.0
libtpu: 0.0.40
codegen_flags: <defaults>
</compile_context>

<pallas_src>
import jax
import jax.numpy as jnp
from jax import lax
from jax.experimental import pallas as pl
from jax.experimental.pallas import tpu as pltpu


def _round_up(x, m):
    return (x + m - 1) // m * m


def _asap_kernel(h1_ref, m1_ref, h2_ref, m2_ref,
                 w1_ref, b1_ref, w2_ref, b2_ref,
                 out_ref, acc1_ref, acc2_ref):
    """Grid = (batch tiles, seq tiles); the seq axis is the reduction axis.

    h{1,2}_ref : (TB, TS, H) bf16  encoder last_hidden_state tile
    m{1,2}_ref : (TB, TS)    bf16  attention-mask tile (2-D, lane-dense)
    w1_ref     : (3H, 3H)    bf16  ClassificationHead.dense weight (transposed, Buffered(1))
    b1_ref     : (1, 3H)     f32
    w2_ref     : (3H, Lp)    bf16  out_proj weight (transposed, lane-padded, Buffered(1))
    b2_ref     : (1, Lp)     f32
    out_ref    : (TB, Lp)    f32   logits (lane-padded)
    acc{1,2}   : (TB, H)     f32   masked-sum accumulators (persist across seq tiles)
    """
    s = pl.program_id(1)
    n_s = pl.num_programs(1)
    H = acc1_ref.shape[-1]

    @pl.when(s == 0)
    def _init():
        acc1_ref[...] = jnp.zeros_like(acc1_ref)
        acc2_ref[...] = jnp.zeros_like(acc2_ref)

    # Masked partial sums over this seq tile.  Mask is {0,1}, so the
    # mask-multiply is exact in bf16; reduction/accumulation happen in f32.
    h1 = h1_ref[...]                                    # (TB, TS, H) bf16
    m1 = m1_ref[...][:, :, None]                        # (TB, TS, 1) bf16
    acc1_ref[...] += jnp.sum((h1 * m1).astype(jnp.float32), axis=1)

    h2 = h2_ref[...]
    m2 = m2_ref[...][:, :, None]
    acc2_ref[...] += jnp.sum((h2 * m2).astype(jnp.float32), axis=1)

    @pl.when(s == n_s - 1)
    def _finalize():
        # The mean-pool division by sum_mask (a positive per-row scalar)
        # cancels under L2 normalization, so it is omitted entirely.
        # F.normalize(p=2, dim=1): x / max(||x||, 1e-12)
        #                        == x * rsqrt(max(||x||^2, 1e-24))   (EUP rsqrt)
        def normalize(acc):
            sumsq = jnp.sum(acc * acc, axis=-1, keepdims=True)
            return acc * lax.rsqrt(jnp.maximum(sumsq, 1e-24))

        e1 = normalize(acc1_ref[...])                   # (TB, H) f32
        e2 = normalize(acc2_ref[...])
        e3 = jnp.abs(e1 - e2)

        # features = concat([e1, e2, |e1-e2|], 1) @ W1 + b1, expressed as three
        # matmuls over static row-slices of W1 (no in-kernel concat).
        # bf16 MXU inputs, f32 accumulation.
        e1b = e1.astype(jnp.bfloat16)
        e2b = e2.astype(jnp.bfloat16)
        e3b = e3.astype(jnp.bfloat16)
        pre = (jnp.dot(e1b, w1_ref[0:H, :], preferred_element_type=jnp.float32)
               + jnp.dot(e2b, w1_ref[H:2 * H, :], preferred_element_type=jnp.float32)
               + jnp.dot(e3b, w1_ref[2 * H:3 * H, :], preferred_element_type=jnp.float32)
               + b1_ref[...])
        hidden = jnp.tanh(pre)                          # (TB, 3H) f32

        out_ref[...] = (jnp.dot(hidden.astype(jnp.bfloat16), w2_ref[...],
                                preferred_element_type=jnp.float32)
                        + b2_ref[...])                  # lane-dense (TB, Lp) store


def _vmem_footprint_bytes(TB, TS, H, L3, Lp):
    """Conservative *padded* VMEM footprint for the chosen tiling."""
    # Streamed hidden tiles: (TB, TS, H) bf16, 2 arrays x 2 pipeline buffers.
    h_tile = TB * _round_up(TS, 16) * _round_up(H, 128) * 2
    # Streamed mask tiles: (TB, TS) bf16, lane-dense, 2 arrays x 2 buffers.
    m_tile = _round_up(TB, 16) * _round_up(TS, 128) * 2
    streamed = 2 * 2 * (h_tile + m_tile)
    # Resident head weights, single-buffered (pl.Buffered(1)).
    weights = (_round_up(L3, 16) * _round_up(L3, 128) * 2      # W1 bf16
               + 8 * _round_up(L3, 128) * 4                    # b1 f32
               + _round_up(L3, 16) * _round_up(Lp, 128) * 2    # W2 bf16
               + 8 * _round_up(Lp, 128) * 4)                   # b2 f32
    # f32 accumulators + double-buffered logits tile.
    scratch = 2 * TB * _round_up(H, 128) * 4
    out_tile = 2 * TB * _round_up(Lp, 128) * 4
    # Per-step f32 intermediate of the masked reduction (compiler scratch).
    interm = TB * _round_up(TS, 8) * _round_up(H, 128) * 4
    return streamed + weights + scratch + out_tile + interm


def asap_forward(hidden_1, mask_1, hidden_2, mask_2, params, label_id=None):
    """Fused mean-pool + L2-normalize + classification head via Pallas.

    hidden_{1,2}: (B, S, H) float  encoder last_hidden_state
    mask_{1,2}  : (B, S)    int/float attention mask
    params      : w1 (3H,3H), b1 (1,3H), w2 (3H,L), b2 (1,L)  (pre-transposed)
    """
    B, S, H = hidden_1.shape
    L = params["w2"].shape[1]
    L3 = 3 * H
    LANE = 128
    Lp = _round_up(L, LANE)

    # ---- per-generation VMEM budget ---------------------------------------
    try:
        vmem_cap = int(pltpu.get_tpu_info().vmem_capacity_bytes)
    except Exception:
        vmem_cap = 64 * 1024 * 1024            # conservative (v7x-sized) fallback
    # Leave headroom: ~112 MiB usable on v5e/v6e (128 MiB), ~56 MiB on v7x (64 MiB).
    vmem_budget = vmem_cap - max(8 * 1024 * 1024, vmem_cap // 8)

    # ---- tile selection -----------------------------------------------------
    TB = 128 if B >= 128 else _round_up(B, 8)
    B_pad = _round_up(B, TB)
    # Megacore: guarantee >= 2 batch tiles whenever the batch allows so the
    # "parallel" axis can feed both TensorCores (v7x).
    if B_pad // TB == 1 and TB > 8:
        TB = max(8, _round_up(-(-B // 2), 8))
        B_pad = _round_up(B, TB)

    # Largest seq tile (multiple of 8) whose padded footprint fits the budget.
    TS = _round_up(S, 8)
    while TS > 8 and _vmem_footprint_bytes(TB, TS, H, L3, Lp) > vmem_budget:
        TS = max(8, _round_up(TS // 2, 8))
    n_s = -(-S // TS)
    S_pad = n_s * TS

    need = _vmem_footprint_bytes(TB, TS, H, L3, Lp)
    vmem_limit = int(min(max(vmem_budget, need + (4 << 20)), vmem_cap - (2 << 20)))

    # ---- wrapper-side layout prep (one-off, cheap) --------------------------
    def prep_h(h):
        h = h.astype(jnp.bfloat16)           # halve HBM bytes of dominant loads
        if (B_pad, S_pad) != (B, S):
            h = jnp.pad(h, ((0, B_pad - B), (0, S_pad - S), (0, 0)))
        return h

    def prep_m(m):
        m = m.astype(jnp.bfloat16)           # {0,1}: exact in bf16
        if (B_pad, S_pad) != (B, S):
            m = jnp.pad(m, ((0, B_pad - B), (0, S_pad - S)))
        return m                              # stays 2-D, lane-dense along S

    h1 = prep_h(hidden_1)
    h2 = prep_h(hidden_2)
    m1 = prep_m(mask_1)
    m2 = prep_m(mask_2)

    # Head weights: bf16 MXU inputs (f32 accumulation in-kernel), biases f32.
    w1 = params["w1"].astype(jnp.bfloat16)                            # (3H, 3H)
    b1 = params["b1"].reshape(1, L3).astype(jnp.float32)              # (1, 3H)
    # Lane-pad out_proj so the final store is an unmasked full-lane vst.
    w2 = jnp.pad(params["w2"].astype(jnp.bfloat16), ((0, 0), (0, Lp - L)))
    b2 = jnp.pad(params["b2"].reshape(1, L).astype(jnp.float32),
                 ((0, 0), (0, Lp - L)))

    grid = (B_pad // TB, S_pad // TS)

    logits_padded = pl.pallas_call(
        _asap_kernel,
        out_shape=jax.ShapeDtypeStruct((B_pad, Lp), jnp.float32),
        grid_spec=pltpu.PrefetchScalarGridSpec(
            num_scalar_prefetch=0,
            grid=grid,
            in_specs=[
                pl.BlockSpec((TB, TS, H), lambda b, s: (b, s, 0)),   # h1 tile
                pl.BlockSpec((TB, TS), lambda b, s: (b, s)),         # m1 tile (2-D)
                pl.BlockSpec((TB, TS, H), lambda b, s: (b, s, 0)),   # h2 tile
                pl.BlockSpec((TB, TS), lambda b, s: (b, s)),         # m2 tile (2-D)
                # Constant index_map head weights: single-buffered, VMEM-resident.
                pl.BlockSpec((L3, L3), lambda b, s: (0, 0),
                             pipeline_mode=pl.Buffered(1)),          # W1
                pl.BlockSpec((1, L3), lambda b, s: (0, 0),
                             pipeline_mode=pl.Buffered(1)),          # b1
                pl.BlockSpec((L3, Lp), lambda b, s: (0, 0),
                             pipeline_mode=pl.Buffered(1)),          # W2
                pl.BlockSpec((1, Lp), lambda b, s: (0, 0),
                             pipeline_mode=pl.Buffered(1)),          # b2
            ],
            out_specs=pl.BlockSpec((TB, Lp), lambda b, s: (b, 0)),
            scratch_shapes=[pltpu.VMEM((TB, H), jnp.float32),
                            pltpu.VMEM((TB, H), jnp.float32)]),
        compiler_params=pltpu.CompilerParams(
            dimension_semantics=("parallel", "arbitrary"),
            vmem_limit_bytes=vmem_limit),
    )(h1, m1, h2, m2, w1, b1, w2, b2)

    logits = logits_padded[:B, :L]

    loss = None
    if label_id is not None:
        # CrossEntropyLoss (mean reduction) — tiny scalar reduction, JAX glue.
        logp = jax.nn.log_softmax(logits, axis=-1)
        loss = -jnp.mean(jnp.take_along_axis(
            logp, label_id.reshape(-1, 1), axis=1))
    return logits, loss


def make_params(key, hidden_size, num_labels):
    """Deterministic ClassificationHead params. n_multi = 3 (use_multiplication=False)."""
    n_multi = 3
    in_dim = hidden_size * n_multi
    k1, k2, k3, k4 = jax.random.split(key, 4)
    # Linear weights stored transposed: (in, out)
    w1 = jax.random.normal(k1, (in_dim, in_dim), jnp.float32) * 0.05
    b1 = jax.random.normal(k2, (1, in_dim), jnp.float32) * 0.05
    w2 = jax.random.normal(k3, (in_dim, num_labels), jnp.float32) * 0.05
    b2 = jax.random.normal(k4, (1, num_labels), jnp.float32) * 0.05
    return {"w1": w1, "b1": b1, "w2": w2, "b2": b2}


if __name__ == "__main__":
    # Small synthetic shapes: batch=2, seq=8, hidden=32, vocab=50, num_labels=4.
    B, S, H, V, L = 2, 8, 32, 50, 4
    key = jax.random.PRNGKey(0)
    k_emb, k_id1, k_id2, k_par, k_lab = jax.random.split(key, 5)

    # TODO(synk): the pretrained AutoModel transformer encoder is not
    # re-implemented; a deterministic embedding lookup stands in for
    # encoder_outputs.last_hidden_state.
    embed_table = jax.random.normal(k_emb, (V, H), jnp.float32)

    input_ids_1 = jax.random.randint(k_id1, (B, S), 0, V)
    input_ids_2 = jax.random.randint(k_id2, (B, S), 0, V)
    # Masks with some padding at the end of each sequence.
    attention_mask_1 = (jnp.arange(S)[None, :] < jnp.array([[6], [8]])).astype(jnp.int32)
    attention_mask_2 = (jnp.arange(S)[None, :] < jnp.array([[8], [5]])).astype(jnp.int32)

    hidden_1 = embed_table[input_ids_1]   # (B, S, H) -- stand-in encoder output
    hidden_2 = embed_table[input_ids_2]

    params = make_params(k_par, H, L)
    label_id = jax.random.randint(k_lab, (B,), 0, L)

    logits, loss = asap_forward(hidden_1, attention_mask_1,
                                hidden_2, attention_mask_2,
                                params, label_id=label_id)
    jax.block_until_ready(logits)
    jax.block_until_ready(loss)

    assert logits.shape == (B, L) and logits.dtype == jnp.float32
    assert loss.shape == ()
    print("KERNEL_OK")
</pallas_src>

<mosaic_0001>
module attributes {stable_mosaic.version = 11 : i64} {
  func.func @_asap_kernel(%arg0: i32, %arg1: i32, %arg2: memref<8x8x32xbf16, #tpu.memory_space<vmem>>, %arg3: memref<8x8xbf16, #tpu.memory_space<vmem>>, %arg4: memref<8x8x32xbf16, #tpu.memory_space<vmem>>, %arg5: memref<8x8xbf16, #tpu.memory_space<vmem>>, %arg6: memref<96x96xbf16, #tpu.memory_space<vmem>>, %arg7: memref<1x96xf32, #tpu.memory_space<vmem>>, %arg8: memref<96x128xbf16, #tpu.memory_space<vmem>>, %arg9: memref<1x128xf32, #tpu.memory_space<vmem>>, %arg10: memref<8x128xf32, #tpu.memory_space<vmem>>, %arg11: memref<8x32xf32, #tpu.memory_space<vmem>>, %arg12: memref<8x32xf32, #tpu.memory_space<vmem>>) attributes {dimension_semantics = [#tpu.dimension_semantics<parallel>, #tpu.dimension_semantics<arbitrary>], iteration_bounds = array<i64: 1, 1>, scalar_prefetch = 0 : i64, scratch_operands = 2 : i64, tpu.core_type = #tpu.core_type<tc>, window_params = [{transform_indices = @transform_0, window_bounds = array<i64: 8, 8, 32>}, {transform_indices = @transform_1, window_bounds = array<i64: 8, 8>}, {transform_indices = @transform_2, window_bounds = array<i64: 8, 8, 32>}, {transform_indices = @transform_3, window_bounds = array<i64: 8, 8>}, {pipeline_mode = #tpu.pipeline_mode<synchronous>, transform_indices = @transform_4, window_bounds = array<i64: 96, 96>}, {pipeline_mode = #tpu.pipeline_mode<synchronous>, transform_indices = @transform_5, window_bounds = array<i64: 1, 96>}, {pipeline_mode = #tpu.pipeline_mode<synchronous>, transform_indices = @transform_6, window_bounds = array<i64: 96, 128>}, {pipeline_mode = #tpu.pipeline_mode<synchronous>, transform_indices = @transform_7, window_bounds = array<i64: 1, 128>}, {transform_indices = @transform_8, window_bounds = array<i64: 8, 128>}]} {
    %c0_i32 = arith.constant 0 : i32
    %0 = arith.cmpi eq, %arg1, %c0_i32 : i32
    %1 = arith.extui %0 : i1 to i32
    %c0_i32_0 = arith.constant 0 : i32
    %2 = arith.cmpi ne, %1, %c0_i32_0 : i32
    scf.if %2 {
      %cst_21 = arith.constant 0.000000e+00 : f32
      %26 = vector.broadcast %cst_21 : f32 to vector<8x32xf32>
      %c0_22 = arith.constant 0 : index
      %c0_23 = arith.constant 0 : index
      %27 = vector.load %arg11[%c0_22, %c0_23] : memref<8x32xf32, #tpu.memory_space<vmem>>, vector<8x32xf32>
      tpu.vector_store %arg11[%c0_22, %c0_23], %26 {strides = array<i32>} : memref<8x32xf32, #tpu.memory_space<vmem>>, vector<8x32xf32>,
      %cst_24 = arith.constant 0.000000e+00 : f32
      %28 = vector.broadcast %cst_24 : f32 to vector<8x32xf32>
      %c0_25 = arith.constant 0 : index
      %c0_26 = arith.constant 0 : index
      %29 = vector.load %arg12[%c0_25, %c0_26] : memref<8x32xf32, #tpu.memory_space<vmem>>, vector<8x32xf32>
      tpu.vector_store %arg12[%c0_25, %c0_26], %28 {strides = array<i32>} : memref<8x32xf32, #tpu.memory_space<vmem>>, vector<8x32xf32>,
    } else {
    }
    %c0 = arith.constant 0 : index
    %c0_1 = arith.constant 0 : index
    %c0_2 = arith.constant 0 : index
    %3 = vector.load %arg2[%c0, %c0_1, %c0_2] : memref<8x8x32xbf16, #tpu.memory_space<vmem>>, vector<8x8x32xbf16>
    %c0_3 = arith.constant 0 : index
    %c0_4 = arith.constant 0 : index
    %4 = vector.load %arg3[%c0_3, %c0_4] : memref<8x8xbf16, #tpu.memory_space<vmem>>, vector<8x8xbf16>
    %5 = vector.shape_cast %4 : vector<8x8xbf16> to vector<8x8x1xbf16>
    %c0_5 = arith.constant 0 : index
    %c0_6 = arith.constant 0 : index
    %6 = vector.load %arg11[%c0_5, %c0_6] : memref<8x32xf32, #tpu.memory_space<vmem>>, vector<8x32xf32>
    %7 = vector.broadcast %5 : vector<8x8x1xbf16> to vector<8x8x32xbf16>
    %8 = arith.mulf %3, %7 : vector<8x8x32xbf16>
    %9 = arith.extf %8 : vector<8x8x32xbf16> to vector<8x8x32xf32>
    %cst = arith.constant dense<0.000000e+00> : vector<8x32xf32>
    %10 = vector.multi_reduction <add>, %9, %cst [1] : vector<8x8x32xf32> to vector<8x32xf32>
    %11 = arith.addf %6, %10 : vector<8x32xf32>
    %c0_7 = arith.constant 0 : index
    %c0_8 = arith.constant 0 : index
    %12 = vector.load %arg11[%c0_7, %c0_8] : memref<8x32xf32, #tpu.memory_space<vmem>>, vector<8x32xf32>
    tpu.vector_store %arg11[%c0_7, %c0_8], %11 {strides = array<i32>} : memref<8x32xf32, #tpu.memory_space<vmem>>, vector<8x32xf32>,
    %c0_9 = arith.constant 0 : index
    %c0_10 = arith.constant 0 : index
    %c0_11 = arith.constant 0 : index
    %13 = vector.load %arg4[%c0_9, %c0_10, %c0_11] : memref<8x8x32xbf16, #tpu.memory_space<vmem>>, vector<8x8x32xbf16>
    %c0_12 = arith.constant 0 : index
    %c0_13 = arith.constant 0 : index
    %14 = vector.load %arg5[%c0_12, %c0_13] : memref<8x8xbf16, #tpu.memory_space<vmem>>, vector<8x8xbf16>
    %15 = vector.shape_cast %14 : vector<8x8xbf16> to vector<8x8x1xbf16>
    %c0_14 = arith.constant 0 : index
    %c0_15 = arith.constant 0 : index
    %16 = vector.load %arg12[%c0_14, %c0_15] : memref<8x32xf32, #tpu.memory_space<vmem>>, vector<8x32xf32>
    %17 = vector.broadcast %15 : vector<8x8x1xbf16> to vector<8x8x32xbf16>
    %18 = arith.mulf %13, %17 : vector<8x8x32xbf16>
    %19 = arith.extf %18 : vector<8x8x32xbf16> to vector<8x8x32xf32>
    %cst_16 = arith.constant dense<0.000000e+00> : vector<8x32xf32>
    %20 = vector.multi_reduction <add>, %19, %cst_16 [1] : vector<8x8x32xf32> to vector<8x32xf32>
    %21 = arith.addf %16, %20 : vector<8x32xf32>
    %c0_17 = arith.constant 0 : index
    %c0_18 = arith.constant 0 : index
    %22 = vector.load %arg12[%c0_17, %c0_18] : memref<8x32xf32, #tpu.memory_space<vmem>>, vector<8x32xf32>
    tpu.vector_store %arg12[%c0_17, %c0_18], %21 {strides = array<i32>} : memref<8x32xf32, #tpu.memory_space<vmem>>, vector<8x32xf32>,
    %c0_i32_19 = arith.constant 0 : i32
    %23 = arith.cmpi eq, %arg1, %c0_i32_19 : i32
    %24 = arith.extui %23 : i1 to i32
    %c0_i32_20 = arith.constant 0 : i32
    %25 = arith.cmpi ne, %24, %c0_i32_20 : i32
    scf.if %25 {
      %c0_21 = arith.constant 0 : index
      %c0_22 = arith.constant 0 : index
      %26 = vector.load %arg11[%c0_21, %c0_22] : memref<8x32xf32, #tpu.memory_space<vmem>>, vector<8x32xf32>
      %27 = arith.mulf %26, %26 : vector<8x32xf32>
      %cst_23 = arith.constant dense<0.000000e+00> : vector<8xf32>
      %28 = vector.multi_reduction <add>, %27, %cst_23 [1] : vector<8x32xf32> to vector<8xf32>
      %29 = vector.shape_cast %28 : vector<8xf32> to vector<8x1xf32>
      %cst_24 = arith.constant 1.000000e-24 : f32
      %30 = vector.broadcast %cst_24 : f32 to vector<8x1xf32>
      %31 = arith.maximumf %29, %30 : vector<8x1xf32>
      %32 = math.rsqrt %31 : vector<8x1xf32>
      %33 = vector.broadcast %32 : vector<8x1xf32> to vector<8x32xf32>
      %34 = arith.mulf %26, %33 : vector<8x32xf32>
      %c0_25 = arith.constant 0 : index
      %c0_26 = arith.constant 0 : index
      %35 = vector.load %arg12[%c0_25, %c0_26] : memref<8x32xf32, #tpu.memory_space<vmem>>, vector<8x32xf32>
      %36 = arith.mulf %35, %35 : vector<8x32xf32>
      %cst_27 = arith.constant dense<0.000000e+00> : vector<8xf32>
      %37 = vector.multi_reduction <add>, %36, %cst_27 [1] : vector<8x32xf32> to vector<8xf32>
      %38 = vector.shape_cast %37 : vector<8xf32> to vector<8x1xf32>
      %cst_28 = arith.constant 1.000000e-24 : f32
      %39 = vector.broadcast %cst_28 : f32 to vector<8x1xf32>
      %40 = arith.maximumf %38, %39 : vector<8x1xf32>
      %41 = math.rsqrt %40 : vector<8x1xf32>
      %42 = vector.broadcast %41 : vector<8x1xf32> to vector<8x32xf32>
      %43 = arith.mulf %35, %42 : vector<8x32xf32>
      %44 = arith.subf %34, %43 : vector<8x32xf32>
      %45 = math.absf %44 : vector<8x32xf32>
      %46 = arith.truncf %34 : vector<8x32xf32> to vector<8x32xbf16>
      %47 = arith.truncf %43 : vector<8x32xf32> to vector<8x32xbf16>
      %48 = arith.truncf %45 : vector<8x32xf32> to vector<8x32xbf16>
      %c0_29 = arith.constant 0 : index
      %c0_30 = arith.constant 0 : index
      %49 = vector.load %arg6[%c0_29, %c0_30] : memref<96x96xbf16, #tpu.memory_space<vmem>>, vector<32x96xbf16>
      %cst_31 = arith.constant dense<0.000000e+00> : vector<8x96xf32>
      %50 = tpu.matmul %46, %49, %cst_31 {dimension_numbers = #tpu.dot_dimension_numbers<[1], [0], [0], [1], [0, 0, 1, 1], [], []>} : vector<8x32xbf16>, vector<32x96xbf16>, vector<8x96xf32> -> vector<8x96xf32>
      %c32 = arith.constant 32 : index
      %c0_32 = arith.constant 0 : index
      %51 = vector.load %arg6[%c32, %c0_32] : memref<96x96xbf16, #tpu.memory_space<vmem>>, vector<32x96xbf16>
      %cst_33 = arith.constant dense<0.000000e+00> : vector<8x96xf32>
      %52 = tpu.matmul %47, %51, %cst_33 {dimension_numbers = #tpu.dot_dimension_numbers<[1], [0], [0], [1], [0, 0, 1, 1], [], []>} : vector<8x32xbf16>, vector<32x96xbf16>, vector<8x96xf32> -> vector<8x96xf32>
      %53 = arith.addf %50, %52 : vector<8x96xf32>
      %c64 = arith.constant 64 : index
      %c0_34 = arith.constant 0 : index
      %54 = vector.load %arg6[%c64, %c0_34] : memref<96x96xbf16, #tpu.memory_space<vmem>>, vector<32x96xbf16>
      %cst_35 = arith.constant dense<0.000000e+00> : vector<8x96xf32>
      %55 = tpu.matmul %48, %54, %cst_35 {dimension_numbers = #tpu.dot_dimension_numbers<[1], [0], [0], [1], [0, 0, 1, 1], [], []>} : vector<8x32xbf16>, vector<32x96xbf16>, vector<8x96xf32> -> vector<8x96xf32>
      %56 = arith.addf %53, %55 : vector<8x96xf32>
      %c0_36 = arith.constant 0 : index
      %c0_37 = arith.constant 0 : index
      %57 = vector.load %arg7[%c0_36, %c0_37] : memref<1x96xf32, #tpu.memory_space<vmem>>, vector<1x96xf32>
      %58 = vector.broadcast %57 : vector<1x96xf32> to vector<8x96xf32>
      %59 = arith.addf %56, %58 : vector<8x96xf32>
      %60 = math.tanh %59 : vector<8x96xf32>
      %61 = arith.truncf %60 : vector<8x96xf32> to vector<8x96xbf16>
      %c0_38 = arith.constant 0 : index
      %c0_39 = arith.constant 0 : index
      %62 = vector.load %arg8[%c0_38, %c0_39] : memref<96x128xbf16, #tpu.memory_space<vmem>>, vector<96x128xbf16>
      %cst_40 = arith.constant dense<0.000000e+00> : vector<8x128xf32>
      %63 = tpu.matmul %61, %62, %cst_40 {dimension_numbers = #tpu.dot_dimension_numbers<[1], [0], [0], [1], [0, 0, 1, 1], [], []>} : vector<8x96xbf16>, vector<96x128xbf16>, vector<8x128xf32> -> vector<8x128xf32>
      %c0_41 = arith.constant 0 : index
      %c0_42 = arith.constant 0 : index
      %64 = vector.load %arg9[%c0_41, %c0_42] : memref<1x128xf32, #tpu.memory_space<vmem>>, vector<1x128xf32>
      %65 = vector.broadcast %64 : vector<1x128xf32> to vector<8x128xf32>
      %66 = arith.addf %63, %65 : vector<8x128xf32>
      %c0_43 = arith.constant 0 : index
      %c0_44 = arith.constant 0 : index
      %67 = vector.load %arg10[%c0_43, %c0_44] : memref<8x128xf32, #tpu.memory_space<vmem>>, vector<8x128xf32>
      tpu.vector_store %arg10[%c0_43, %c0_44], %66 {strides = array<i32>} : memref<8x128xf32, #tpu.memory_space<vmem>>, vector<8x128xf32>,
    } else {
    }
    return
  }
  func.func @transform_0(%arg0: i32, %arg1: i32) -> (i32, i32, i32) {
    %c0_i32 = arith.constant 0 : i32
    %c0_i32_0 = arith.constant 0 : i32
    return %arg0, %arg1, %c0_i32 : i32, i32, i32
  }
  func.func @transform_1(%arg0: i32, %arg1: i32) -> (i32, i32) {
    %c0_i32 = arith.constant 0 : i32
    return %arg0, %arg1 : i32, i32
  }
  func.func @transform_2(%arg0: i32, %arg1: i32) -> (i32, i32, i32) {
    %c0_i32 = arith.constant 0 : i32
    %c0_i32_0 = arith.constant 0 : i32
    return %arg0, %arg1, %c0_i32 : i32, i32, i32
  }
  func.func @transform_3(%arg0: i32, %arg1: i32) -> (i32, i32) {
    %c0_i32 = arith.constant 0 : i32
    return %arg0, %arg1 : i32, i32
  }
  func.func @transform_4(%arg0: i32, %arg1: i32) -> (i32, i32) {
    %c0_i32 = arith.constant 0 : i32
    %c0_i32_0 = arith.constant 0 : i32
    %c0_i32_1 = arith.constant 0 : i32
    return %c0_i32, %c0_i32_0 : i32, i32
  }
  func.func @transform_5(%arg0: i32, %arg1: i32) -> (i32, i32) {
    %c0_i32 = arith.constant 0 : i32
    %c0_i32_0 = arith.constant 0 : i32
    %c0_i32_1 = arith.constant 0 : i32
    return %c0_i32, %c0_i32_0 : i32, i32
  }
  func.func @transform_6(%arg0: i32, %arg1: i32) -> (i32, i32) {
    %c0_i32 = arith.constant 0 : i32
    %c0_i32_0 = arith.constant 0 : i32
    %c0_i32_1 = arith.constant 0 : i32
    return %c0_i32, %c0_i32_0 : i32, i32
  }
  func.func @transform_7(%arg0: i32, %arg1: i32) -> (i32, i32) {
    %c0_i32 = arith.constant 0 : i32
    %c0_i32_0 = arith.constant 0 : i32
    %c0_i32_1 = arith.constant 0 : i32
    return %c0_i32, %c0_i32_0 : i32, i32
  }
  func.func @transform_8(%arg0: i32, %arg1: i32) -> (i32, i32) {
    %c0_i32 = arith.constant 0 : i32
    %c0_i32_0 = arith.constant 0 : i32
    return %arg0, %c0_i32 : i32, i32
  }
}

</mosaic_0001>

<llo_original>
// kernel: tpu_custom_call.1
$region0: #{tpu_custom_call.1}
  #allocation0 [shape = 'u32[]', space=smem, size = 0x4, offset = 0x4, fixed_abs, tag = 'smem constant byte address 0x4 - core index']
  #allocation1 [shape = 'u32[144,128]{1,0:T(1,128)}', space=vmem, size = 0x12000, scoped, tag = 'internal scratch']
  #allocation2 [shape = 'f32[8,32]{1,0:T(8,128)}', space=vmem, size = 0x1000, scoped, tag = 'scratch operand']
  #allocation3 [shape = 'f32[8,32]{1,0:T(8,128)}', space=vmem, size = 0x1000, scoped, tag = 'scratch operand']
  %s0 = inlined_call_operand.hbm [shape: bf16[8,8,32], index: 0, kind: input, shape index: {}]
  %s1 = inlined_call_operand.hbm [shape: bf16[8,8], index: 1, kind: input, shape index: {}]
  %s2 = inlined_call_operand.hbm [shape: bf16[8,8,32], index: 2, kind: input, shape index: {}]
  %s3 = inlined_call_operand.vmem [shape: bf16[8,8], index: 3, kind: input, shape index: {}]
  %s4 = inlined_call_operand.hbm [shape: bf16[96,96], index: 4, kind: input, shape index: {}]
  %s5 = inlined_call_operand.vmem [shape: f32[1,96], index: 5, kind: input, shape index: {}]
  %s6 = inlined_call_operand.hbm [shape: bf16[96,128], index: 6, kind: input, shape index: {}]
  %s7 = inlined_call_operand.vmem [shape: f32[1,128], index: 7, kind: input, shape index: {}]
  %s8 = inlined_call_operand.hbm [shape: f32[8,128], index: 8, kind: output, shape index: {}]
  %s9 = sld [smem:[#allocation0]]
  $region70: #{tpu_custom_call.1} parent=0
    _
  %s11 = ssub.s32 1, %s9
  %s12 = scalar_select 0, %s11, %s9
  $region1: #{tpu_custom_call.1} parent=0
    #allocation4 [shape = 'u8[16384]{0}', space=vmem, size = 0x4000, scoped, tag = 'input window, operand 0, single buffered']
    #allocation5 [shape = 's32[1]{0}', space=sflag, size = 0x4, scoped, tag = 'scoped memory for tpu_custom_call.1']
    #allocation6 [shape = 's32[1]{0}', space=sflag, size = 0x4, scoped, tag = 'scoped memory for tpu_custom_call.1']
    #allocation7 [shape = 'u8[2048]{0}', space=vmem, size = 0x800, scoped, tag = 'input window, operand 1, single buffered']
    #allocation8 [shape = 's32[1]{0}', space=sflag, size = 0x4, scoped, tag = 'scoped memory for tpu_custom_call.1']
    #allocation9 [shape = 'u8[16384]{0}', space=vmem, size = 0x4000, scoped, tag = 'input window, operand 2, single buffered']
    #allocation10 [shape = 'u8[24576]{0}', space=vmem, size = 0x6000, scoped, tag = 'input window, operand 4, single buffered']
    #allocation11 [shape = 's32[1]{0}', space=sflag, size = 0x4, scoped, tag = 'scoped memory for tpu_custom_call.1']
    #allocation12 [shape = 'u8[24576]{0}', space=vmem, size = 0x6000, scoped, tag = 'input window, operand 6, single buffered']
    #allocation13 [shape = 'u8[4096]{0}', space=vmem, size = 0x1000, scoped, tag = 'output window, operand 0, single buffered']
    %13 = vsyncpa [#allocation5], 0
    %14 = vsyncpa [#allocation8], 0
    %15 = vsyncpa [#allocation11], 0
    %16 = vsyncpa [#allocation6], 0
    // Predicated region
    $region2: #{tpu_custom_call.1} parent=1 // pred_check
      _
    $region3: #{tpu_custom_call.1} parent=1 // pred_check_branch
      %18 = sbr.rel (0) target = $region5
    $region4: #{tpu_custom_call.1} parent=1 // pred_region
      %s20 = ssub.s32 512, 512
      %21 = vsyncadd [#allocation5], %s20
      %s22 = sshll.u32 [#allocation4], 4
      %s23 = int_to_ptr.vmem [resolvable:$true] %s22
      %28 = dma.hbm_to_vmem [thread:$0]  %s0, 512, %s23, [#allocation5], 64, 64, 4
    $region5: #{tpu_custom_call.1} parent=1 // pred_fallthru
      _
    // Predicated region
    $region6: #{tpu_custom_call.1} parent=1 // pred_check
      _
    $region7: #{tpu_custom_call.1} parent=1 // pred_check_branch
      %30 = sbr.rel (0) target = $region9
    $region8: #{tpu_custom_call.1} parent=1 // pred_region
      %s32 = ssub.s32 64, 64
      %33 = vsyncadd [#allocation8], %s32
      %s35 = sshll.u32 [#allocation7], 4
      %s36 = int_to_ptr.vmem [resolvable:$true] %s35
      %38 = dma.hbm_to_vmem [thread:$0]  %s1, 64, %s36, [#allocation8]
    $region9: #{tpu_custom_call.1} parent=1 // pred_fallthru
      _
    // Predicated region
    $region10: #{tpu_custom_call.1} parent=1 // pred_check
      _
    $region11: #{tpu_custom_call.1} parent=1 // pred_check_branch
      %40 = sbr.rel (0) target = $region13
    $region12: #{tpu_custom_call.1} parent=1 // pred_region
      %s42 = ssub.s32 512, 512
      %43 = vsyncadd [#allocation8], %s42
      %s44 = sshll.u32 [#allocation9], 4
      %s45 = int_to_ptr.vmem [resolvable:$true] %s44
      %50 = dma.hbm_to_vmem [thread:$0]  %s2, 512, %s45, [#allocation8], 64, 64, 4
    $region13: #{tpu_custom_call.1} parent=1 // pred_fallthru
      _
    // Predicated region
    $region14: #{tpu_custom_call.1} parent=1 // pred_check
      _
    $region15: #{tpu_custom_call.1} parent=1 // pred_check_branch
      %52 = sbr.rel (0) target = $region17
    $region16: #{tpu_custom_call.1} parent=1 // pred_region
      _
    $region17: #{tpu_custom_call.1} parent=1 // pred_fallthru
      _
    // Predicated region
    $region18: #{tpu_custom_call.1} parent=1 // pred_check
      _
    $region19: #{tpu_custom_call.1} parent=1 // pred_check_branch
      %54 = sbr.rel (0) target = $region21
    $region20: #{tpu_custom_call.1} parent=1 // pred_region
      %s56 = ssub.s32 768, 768
      %57 = vsyncadd [#allocation11], %s56
      %s58 = sshll.u32 [#allocation10], 4
      %s59 = int_to_ptr.vmem [resolvable:$true] %s58
      %64 = dma.hbm_to_vmem [thread:$0]  %s4, 768, %s59, [#allocation11], 64, 64, 4
    $region21: #{tpu_custom_call.1} parent=1 // pred_fallthru
      _
    // Predicated region
    $region22: #{tpu_custom_call.1} parent=1 // pred_check
      _
    $region23: #{tpu_custom_call.1} parent=1 // pred_check_branch
      %66 = sbr.rel (0) target = $region25
    $region24: #{tpu_custom_call.1} parent=1 // pred_region
      _
    $region25: #{tpu_custom_call.1} parent=1 // pred_fallthru
      _
    // Predicated region
    $region26: #{tpu_custom_call.1} parent=1 // pred_check
      _
    $region27: #{tpu_custom_call.1} parent=1 // pred_check_branch
      %68 = sbr.rel (0) target = $region29
    $region28: #{tpu_custom_call.1} parent=1 // pred_region
      %s70 = ssub.s32 768, 768
      %71 = vsyncadd [#allocation11], %s70
      %s72 = sshll.u32 [#allocation12], 4
      %s73 = int_to_ptr.vmem [resolvable:$true] %s72
      %78 = dma.hbm_to_vmem [thread:$0]  %s6, 768, %s73, [#allocation11], 64, 64, 4
    $region29: #{tpu_custom_call.1} parent=1 // pred_fallthru
      _
    // Predicated region
    $region30: #{tpu_custom_call.1} parent=1 // pred_check
      _
    $region31: #{tpu_custom_call.1} parent=1 // pred_check_branch
      %80 = sbr.rel (0) target = $region33
    $region32: #{tpu_custom_call.1} parent=1 // pred_region
      _
    $region33: #{tpu_custom_call.1} parent=1 // pred_fallthru
      _
    // Predicated region
    $region34: #{tpu_custom_call.1} parent=1 // pred_check
      _
    $region35: #{tpu_custom_call.1} parent=1 // pred_check_branch
      %82 = sbr.rel (0) target = $region37
    $region36: #{tpu_custom_call.1} parent=1 // pred_region
      %83 = dma.done [#allocation5], 512
    $region37: #{tpu_custom_call.1} parent=1 // pred_fallthru
      _
    // Predicated region
    $region38: #{tpu_custom_call.1} parent=1 // pred_check
      _
    $region39: #{tpu_custom_call.1} parent=1 // pred_check_branch
      %85 = sbr.rel (0) target = $region41
    $region40: #{tpu_custom_call.1} parent=1 // pred_region
      %86 = dma.done [#allocation8], 64
    $region41: #{tpu_custom_call.1} parent=1 // pred_fallthru
      _
    // Predicated region
    $region42: #{tpu_custom_call.1} parent=1 // pred_check
      _
    $region43: #{tpu_custom_call.1} parent=1 // pred_check_branch
      %88 = sbr.rel (0) target = $region45
    $region44: #{tpu_custom_call.1} parent=1 // pred_region
      %89 = dma.done [#allocation8], 512
    $region45: #{tpu_custom_call.1} parent=1 // pred_fallthru
      _
    // Predicated region
    $region46: #{tpu_custom_call.1} parent=1 // pred_check
      _
    $region47: #{tpu_custom_call.1} parent=1 // pred_check_branch
      %91 = sbr.rel (0) target = $region49
    $region48: #{tpu_custom_call.1} parent=1 // pred_region
      %92 = dma.done [#allocation11], 768
    $region49: #{tpu_custom_call.1} parent=1 // pred_fallthru
      _
    // Predicated region
    $region50: #{tpu_custom_call.1} parent=1 // pred_check
      _
    $region51: #{tpu_custom_call.1} parent=1 // pred_check_branch
      %94 = sbr.rel (0) target = $region53
    $region52: #{tpu_custom_call.1} parent=1 // pred_region
      %95 = dma.done [#allocation11], 768
    $region53: #{tpu_custom_call.1} parent=1 // pred_fallthru
      _
    %p97 = scmp.eq.s32.totalorder 0, 0
    // Predicated region
    $region54: #{tpu_custom_call.1} parent=1 // pred_check
      %p98 = pneg %p97
    $region55: #{tpu_custom_call.1} parent=1 // pred_check_branch
      %100 = sbr.rel (%p98) target = $region57
    $region56: #{tpu_custom_call.1} parent=1 // pred_region
      %vm101 = vcmask 261120
      %102 = vst.msk [vmem:[#allocation2] sm:$0xff] %vm101, 0.0
      %103 = vst.msk [vmem:[#allocation3] sm:$0xff] %vm101, 0.0
    $region57: #{tpu_custom_call.1} parent=1 // pred_fallthru
      _
    %v104 = vld [vmem:[#allocation4] sm:$0xf]
    %v105 = vld [vmem:[#allocation4 + $0x4] sm:$0xf]
    %v106 = vld [vmem:[#allocation4 + $0x8] sm:$0xf]
    %v107 = vld [vmem:[#allocation4 + $0xc] sm:$0xf]
    %v108 = vld [vmem:[#allocation4 + $0x10] sm:$0xf]
    %v109 = vld [vmem:[#allocation4 + $0x14] sm:$0xf]
    %v110 = vld [vmem:[#allocation4 + $0x18] sm:$0xf]
    %v111 = vld [vmem:[#allocation4 + $0x1c] sm:$0xf]
    %v112 = vld [vmem:[#allocation7] sm:$0xf]
    %v114 = vpack.i.b16 %v112, %v112
    %v116 = vlaneseq
    %v117 = vshrl.u32 %v116, 7
    %v118 = vsub.s32 0, %v117
    %v119 = vrot.slane %v114, %v118
    %121 = vbcast.lane.c.b16.xlu0 %v119, 256
    %v122 = vpop.permute.xlu0 %121
    %v123 = vshrl.u32 %v112, 16
    %v124 = vpack.i.b16 %v123, %v123
    %v126 = vlaneseq
    %v127 = vshrl.u32 %v126, 7
    %v128 = vsub.s32 0, %v127
    %v129 = vrot.slane %v124, %v128
    %131 = vbcast.lane.c.b16.xlu0 %v129, 256
    %v132 = vpop.permute.xlu0 %131
    %v133 = vlaneseq
    %v134 = vshrl.u32 %v133, 7
    %v135 = vsub.s32 1, %v134
    %v136 = vrot.slane %v114, %v135
    %138 = vbcast.lane.c.b16.xlu0 %v136, 256
    %v139 = vpop.permute.xlu0 %138
    %v140 = vlaneseq
    %v141 = vshrl.u32 %v140, 7
    %v142 = vsub.s32 1, %v141
    %v143 = vrot.slane %v124, %v142
    %145 = vbcast.lane.c.b16.xlu0 %v143, 256
    %v146 = vpop.permute.xlu0 %145
    %v147 = vlaneseq
    %v148 = vshrl.u32 %v147, 7
    %v149 = vsub.s32 2, %v148
    %v150 = vrot.slane %v114, %v149
    %152 = vbcast.lane.c.b16.xlu0 %v150, 256
    %v153 = vpop.permute.xlu0 %152
    %v154 = vlaneseq
    %v155 = vshrl.u32 %v154, 7
    %v156 = vsub.s32 2, %v155
    %v157 = vrot.slane %v124, %v156
    %159 = vbcast.lane.c.b16.xlu0 %v157, 256
    %v160 = vpop.permute.xlu0 %159
    %v161 = vlaneseq
    %v162 = vshrl.u32 %v161, 7
    %v163 = vsub.s32 3, %v162
    %v164 = vrot.slane %v114, %v163
    %166 = vbcast.lane.c.b16.xlu0 %v164, 256
    %v167 = vpop.permute.xlu0 %166
    %v168 = vlaneseq
    %v169 = vshrl.u32 %v168, 7
    %v170 = vsub.s32 3, %v169
    %v171 = vrot.slane %v124, %v170
    %173 = vbcast.lane.c.b16.xlu0 %v171, 256
    %v174 = vpop.permute.xlu0 %173
    %v175 = vld [vmem:[#allocation2] sm:$0xff]
    %v176 = vmul.bf16 %v104, %v122
    %v177 = vmul.bf16 %v105, %v132
    %v178 = vmul.bf16 %v106, %v139
    %v179 = vmul.bf16 %v107, %v146
    %v180 = vmul.bf16 %v108, %v153
    %v181 = vmul.bf16 %v109, %v160
    %v182 = vmul.bf16 %v110, %v167
    %v183 = vmul.bf16 %v111, %v174
    %v184 = vunpack.c.l.bf16 %v176
    %v185 = vunpack.c.l.bf16 %v177
    %v186 = vunpack.c.l.bf16 %v178
    %v187 = vunpack.c.l.bf16 %v179
    %v188 = vunpack.c.l.bf16 %v180
    %v189 = vunpack.c.l.bf16 %v181
    %v190 = vunpack.c.l.bf16 %v182
    %v191 = vunpack.c.l.bf16 %v183
    %vm192 = vcmask 261120
    %v193 = vsel %vm192, %v184, 0.0
    %v194 = vrot.slane %v193, 4
    %v195 = vadd.f32 %v193, %v194
    %v196 = vrot.slane %v195, 2
    %v197 = vadd.f32 %v195, %v196
    %v198 = vrot.slane %v197, 1
    %v199 = vadd.f32 %v197, %v198
    %v200 = vsel %vm192, %v185, 0.0
    %v201 = vrot.slane %v200, 4
    %v202 = vadd.f32 %v200, %v201
    %v203 = vrot.slane %v202, 2
    %v204 = vadd.f32 %v202, %v203
    %v205 = vrot.slane %v204, 1
    %v206 = vadd.f32 %v204, %v205
    %v207 = vsel %vm192, %v186, 0.0
    %v208 = vrot.slane %v207, 4
    %v209 = vadd.f32 %v207, %v208
    %v210 = vrot.slane %v209, 2
    %v211 = vadd.f32 %v209, %v210
    %v212 = vrot.slane %v211, 1
    %v213 = vadd.f32 %v211, %v212
    %v214 = vsel %vm192, %v187, 0.0
    %v215 = vrot.slane %v214, 4
    %v216 = vadd.f32 %v214, %v215
    %v217 = vrot.slane %v216, 2
    %v218 = vadd.f32 %v216, %v217
    %v219 = vrot.slane %v218, 1
    %v220 = vadd.f32 %v218, %v219
    %v221 = vsel %vm192, %v188, 0.0
    %v222 = vrot.slane %v221, 4
    %v223 = vadd.f32 %v221, %v222
    %v224 = vrot.slane %v223, 2
    %v225 = vadd.f32 %v223, %v224
    %v226 = vrot.slane %v225, 1
    %v227 = vadd.f32 %v225, %v226
    %v228 = vsel %vm192, %v189, 0.0
    %v229 = vrot.slane %v228, 4
    %v230 = vadd.f32 %v228, %v229
    %v231 = vrot.slane %v230, 2
    %v232 = vadd.f32 %v230, %v231
    %v233 = vrot.slane %v232, 1
    %v234 = vadd.f32 %v232, %v233
    %v235 = vsel %vm192, %v190, 0.0
    %v236 = vrot.slane %v235, 4
    %v237 = vadd.f32 %v235, %v236
    %v238 = vrot.slane %v237, 2
    %v239 = vadd.f32 %v237, %v238
    %v240 = vrot.slane %v239, 1
    %v241 = vadd.f32 %v239, %v240
    %v242 = vsel %vm192, %v191, 0.0
    %v243 = vrot.slane %v242, 4
    %v244 = vadd.f32 %v242, %v243
    %v245 = vrot.slane %v244, 2
    %v246 = vadd.f32 %v244, %v245
    %v247 = vrot.slane %v246, 1
    %v248 = vadd.f32 %v246, %v247
    %vm257 = vcmask 1041409
    %v258 = vsel %vm257, %v206, %v199
    %vm259 = vcmask 1042434
    %v260 = vsel %vm259, %v213, %v258
    %vm261 = vcmask 1043459
    %v262 = vsel %vm261, %v220, %v260
    %vm263 = vcmask 1044484
    %v264 = vsel %vm263, %v227, %v262
    %vm265 = vcmask 1045509
    %v266 = vsel %vm265, %v234, %v264
    %vm267 = vcmask 1046534
    %v268 = vsel %vm267, %v241, %v266
    %vm269 = vcmask 1047559
    %v270 = vsel %vm269, %v248, %v268
    %v272 = vadd.f32 %v175, %v270
    %273 = vst.msk [vmem:[#allocation2] sm:$0xff] %vm192, %v272
    %v274 = vld [vmem:[#allocation9] sm:$0xf]
    %v275 = vld [vmem:[#allocation9 + $0x4] sm:$0xf]
    %v276 = vld [vmem:[#allocation9 + $0x8] sm:$0xf]
    %v277 = vld [vmem:[#allocation9 + $0xc] sm:$0xf]
    %v278 = vld [vmem:[#allocation9 + $0x10] sm:$0xf]
    %v279 = vld [vmem:[#allocation9 + $0x14] sm:$0xf]
    %v280 = vld [vmem:[#allocation9 + $0x18] sm:$0xf]
    %v281 = vld [vmem:[#allocation9 + $0x1c] sm:$0xf]
    %v282 = vld [vmem:[%s3] sm:$0xf]
    %v284 = vpack.i.b16 %v282, %v282
    %v286 = vlaneseq
    %v287 = vshrl.u32 %v286, 7
    %v288 = vsub.s32 0, %v287
    %v289 = vrot.slane %v284, %v288
    %291 = vbcast.lane.c.b16.xlu0 %v289, 256
    %v292 = vpop.permute.xlu0 %291
    %v293 = vshrl.u32 %v282, 16
    %v294 = vpack.i.b16 %v293, %v293
    %v296 = vlaneseq
    %v297 = vshrl.u32 %v296, 7
    %v298 = vsub.s32 0, %v297
    %v299 = vrot.slane %v294, %v298
    %301 = vbcast.lane.c.b16.xlu0 %v299, 256
    %v302 = vpop.permute.xlu0 %301
    %v303 = vlaneseq
    %v304 = vshrl.u32 %v303, 7
    %v305 = vsub.s32 1, %v304
    %v306 = vrot.slane %v284, %v305
    %308 = vbcast.lane.c.b16.xlu0 %v306, 256
    %v309 = vpop.permute.xlu0 %308
    %v310 = vlaneseq
    %v311 = vshrl.u32 %v310, 7
    %v312 = vsub.s32 1, %v311
    %v313 = vrot.slane %v294, %v312
    %315 = vbcast.lane.c.b16.xlu0 %v313, 256
    %v316 = vpop.permute.xlu0 %315
    %v317 = vlaneseq
    %v318 = vshrl.u32 %v317, 7
    %v319 = vsub.s32 2, %v318
    %v320 = vrot.slane %v284, %v319
    %322 = vbcast.lane.c.b16.xlu0 %v320, 256
    %v323 = vpop.permute.xlu0 %322
    %v324 = vlaneseq
    %v325 = vshrl.u32 %v324, 7
    %v326 = vsub.s32 2, %v325
    %v327 = vrot.slane %v294, %v326
    %329 = vbcast.lane.c.b16.xlu0 %v327, 256
    %v330 = vpop.permute.xlu0 %329
    %v331 = vlaneseq
    %v332 = vshrl.u32 %v331, 7
    %v333 = vsub.s32 3, %v332
    %v334 = vrot.slane %v284, %v333
    %336 = vbcast.lane.c.b16.xlu0 %v334, 256
    %v337 = vpop.permute.xlu0 %336
    %v338 = vlaneseq
    %v339 = vshrl.u32 %v338, 7
    %v340 = vsub.s32 3, %v339
    %v341 = vrot.slane %v294, %v340
    %343 = vbcast.lane.c.b16.xlu0 %v341, 256
    %v344 = vpop.permute.xlu0 %343
    %v345 = vld [vmem:[#allocation3] sm:$0xff]
    %v346 = vmul.bf16 %v274, %v292
    %v347 = vmul.bf16 %v275, %v302
    %v348 = vmul.bf16 %v276, %v309
    %v349 = vmul.bf16 %v277, %v316
    %v350 = vmul.bf16 %v278, %v323
    %v351 = vmul.bf16 %v279, %v330
    %v352 = vmul.bf16 %v280, %v337
    %v353 = vmul.bf16 %v281, %v344
    %v354 = vunpack.c.l.bf16 %v346
    %v355 = vunpack.c.l.bf16 %v347
    %v356 = vunpack.c.l.bf16 %v348
    %v357 = vunpack.c.l.bf16 %v349
    %v358 = vunpack.c.l.bf16 %v350
    %v359 = vunpack.c.l.bf16 %v351
    %v360 = vunpack.c.l.bf16 %v352
    %v361 = vunpack.c.l.bf16 %v353
    %v362 = vsel %vm192, %v354, 0.0
    %v363 = vrot.slane %v362, 4
    %v364 = vadd.f32 %v362, %v363
    %v365 = vrot.slane %v364, 2
    %v366 = vadd.f32 %v364, %v365
    %v367 = vrot.slane %v366, 1
    %v368 = vadd.f32 %v366, %v367
    %v369 = vsel %vm192, %v355, 0.0
    %v370 = vrot.slane %v369, 4
    %v371 = vadd.f32 %v369, %v370
    %v372 = vrot.slane %v371, 2
    %v373 = vadd.f32 %v371, %v372
    %v374 = vrot.slane %v373, 1
    %v375 = vadd.f32 %v373, %v374
    %v376 = vsel %vm192, %v356, 0.0
    %v377 = vrot.slane %v376, 4
    %v378 = vadd.f32 %v376, %v377
    %v379 = vrot.slane %v378, 2
    %v380 = vadd.f32 %v378, %v379
    %v381 = vrot.slane %v380, 1
    %v382 = vadd.f32 %v380, %v381
    %v383 = vsel %vm192, %v357, 0.0
    %v384 = vrot.slane %v383, 4
    %v385 = vadd.f32 %v383, %v384
    %v386 = vrot.slane %v385, 2
    %v387 = vadd.f32 %v385, %v386
    %v388 = vrot.slane %v387, 1
    %v389 = vadd.f32 %v387, %v388
    %v390 = vsel %vm192, %v358, 0.0
    %v391 = vrot.slane %v390, 4
    %v392 = vadd.f32 %v390, %v391
    %v393 = vrot.slane %v392, 2
    %v394 = vadd.f32 %v392, %v393
    %v395 = vrot.slane %v394, 1
    %v396 = vadd.f32 %v394, %v395
    %v397 = vsel %vm192, %v359, 0.0
    %v398 = vrot.slane %v397, 4
    %v399 = vadd.f32 %v397, %v398
    %v400 = vrot.slane %v399, 2
    %v401 = vadd.f32 %v399, %v400
    %v402 = vrot.slane %v401, 1
    %v403 = vadd.f32 %v401, %v402
    %v404 = vsel %vm192, %v360, 0.0
    %v405 = vrot.slane %v404, 4
    %v406 = vadd.f32 %v404, %v405
    %v407 = vrot.slane %v406, 2
    %v408 = vadd.f32 %v406, %v407
    %v409 = vrot.slane %v408, 1
    %v410 = vadd.f32 %v408, %v409
    %v411 = vsel %vm192, %v361, 0.0
    %v412 = vrot.slane %v411, 4
    %v413 = vadd.f32 %v411, %v412
    %v414 = vrot.slane %v413, 2
    %v415 = vadd.f32 %v413, %v414
    %v416 = vrot.slane %v415, 1
    %v417 = vadd.f32 %v415, %v416
    %v426 = vsel %vm257, %v375, %v368
    %v427 = vsel %vm259, %v382, %v426
    %v428 = vsel %vm261, %v389, %v427
    %v429 = vsel %vm263, %v396, %v428
    %v430 = vsel %vm265, %v403, %v429
    %v431 = vsel %vm267, %v410, %v430
    %v432 = vsel %vm269, %v417, %v431
    %v434 = vadd.f32 %v345, %v432
    %435 = vst.msk [vmem:[#allocation3] sm:$0xff] %vm192, %v434
    // Predicated region
    $region58: #{tpu_custom_call.1} parent=1 // pred_check
      %p436 = pneg %p97
    $region59: #{tpu_custom_call.1} parent=1 // pred_check_branch
      %438 = sbr.rel (%p436) target = $region61
    $region60: #{tpu_custom_call.1} parent=1 // pred_region
      %v439 = vld [vmem:[#allocation2] sm:$0xff]
      %v440 = vmul.f32 %v439, %v439
      %v441 = vsel %vm192, %v440, 0.0
      %442 = vadd.xlane.f32.xlu0 %v441
      %v443 = vpop.xlane.xlu0 %442
      %v444 = vmax.f32 %v443, 1e-24
      %v445 = vrsqrt.pop %v444
      %v446 = vmul.f32 %v439, %v445
      %v447 = vld [vmem:[#allocation3] sm:$0xff]
      %v448 = vmul.f32 %v447, %v447
      %v449 = vsel %vm192, %v448, 0.0
      %450 = vadd.xlane.f32.xlu0 %v449
      %v451 = vpop.xlane.xlu0 %450
      %v452 = vmax.f32 %v451, 1e-24
      %v453 = vrsqrt.pop %v452
      %v454 = vmul.f32 %v447, %v453
      %v455 = vsub.f32 %v446, %v454
      %v456 = vand.u32 2147483647, %v455
      %v457 = vpack.c.bf16 %v446, %v446
      %v458 = vpack.c.bf16 %v454, %v454
      %v459 = vpack.c.bf16 %v456, %v456
      %v460 = vld [vmem:[#allocation10] sm:$0xf]
      %v461 = vld [vmem:[#allocation10 + $0x4] sm:$0xf]
      %v462 = vld [vmem:[#allocation10 + $0x8] sm:$0xf]
      %v463 = vld [vmem:[#allocation10 + $0xc] sm:$0xf]
      %v464 = vld [vmem:[#allocation10 + $0x10] sm:$0xf]
      %v465 = vld [vmem:[#allocation10 + $0x14] sm:$0xf]
      %v466 = vld [vmem:[#allocation10 + $0x18] sm:$0xf]
      %v467 = vld [vmem:[#allocation10 + $0x1c] sm:$0xf]
      %v472 = vunpack.c.l.b16 %v464
      %v473 = vunpack.c.l.b16 %v465
      %v474 = vunpack.c.l.b16 %v466
      %v475 = vunpack.c.l.b16 %v467
      %v476 = vpack.c.b16 %v473, %v472
      %v477 = vpack.c.b16 %v475, %v474
      %v481 = vsel %vm192, %v458, 0
      %483 = vmatprep.subr.bf16.mxu0 0
      %484 = vmatpush1.bf16.msra.mxu0 %v476
      %485 = vmatprep.subr.bf16.mxu0 0
      %486 = vmatpush1.bf16.msra.mxu0 %v477
      %487 = vmatprep.subr.bf16.mxu0 0
      %488 = vmatpush1.bf16.msra.mxu0 0
      %489 = vmatprep.subr.bf16.mxu0 0
      %490 = vmatpush1.bf16.msra.mxu0 0
      %491 = vmatprep.subr.bf16.mxu0 0
      %492 = vmatpush1.bf16.msra.mxu0 0
      %493 = vmatprep.subr.bf16.mxu0 0
      %494 = vmatpush1.bf16.msra.mxu0 0
      %495 = vmatprep.subr.bf16.mxu0 0
      %496 = vmatpush1.bf16.msra.mxu0 0
      %497 = vmatprep.subr.bf16.mxu0 0
      %498 = vmatpush1.bf16.msra.mxu0 0
      %499 = vmatprep.subr.bf16.mxu0 0
      %500 = vmatpush1.bf16.msra.mxu0 0
      %501 = vmatprep.subr.bf16.mxu0 0
      %502 = vmatpush1.bf16.msra.mxu0 0
      %503 = vmatprep.subr.bf16.mxu0 0
      %504 = vmatpush1.bf16.msra.mxu0 0
      %505 = vmatprep.subr.bf16.mxu0 0
      %506 = vmatpush1.bf16.msra.mxu0 0
      %507 = vmatprep.subr.bf16.mxu0 0
      %508 = vmatpush1.bf16.msra.mxu0 0
      %509 = vmatprep.subr.bf16.mxu0 0
      %510 = vmatpush1.bf16.msra.mxu0 0
      %511 = vmatprep.subr.bf16.mxu0 0
      %512 = vmatpush1.bf16.msra.mxu0 0
      %513 = vmatprep.subr.bf16.mxu0 0
      %514 = vmatpush1.bf16.msra.mxu0 0
      %515 = vmatprep.mubr.bf16.mxu0 0
      %516 = vmatmul.mubr.bf16.gmra.mrb[0].mxu0 %v481
      %v517 = vpop.f32.mrb[0].mxu0
      %v518 = vadd.f32 0.0, %v517
      %v519 = vpop.f32.mrb[0].mxu0
      %v520 = vpop.f32.mrb[0].mxu0
      %v521 = vpop.f32.mrb[0].mxu0
      %522 = vdwg.mxu0
      %v527 = vunpack.c.l.b16 %v460
      %v528 = vunpack.c.l.b16 %v461
      %v529 = vunpack.c.l.b16 %v462
      %v530 = vunpack.c.l.b16 %v463
      %v531 = vpack.c.b16 %v528, %v527
      %v532 = vpack.c.b16 %v530, %v529
      %v536 = vsel %vm192, %v457, 0
      %538 = vmatprep.subr.bf16.mxu0 0
      %539 = vmatpush1.bf16.msra.mxu0 %v531
      %540 = vmatprep.subr.bf16.mxu0 0
      %541 = vmatpush1.bf16.msra.mxu0 %v532
      %542 = vmatprep.subr.bf16.mxu0 0
      %543 = vmatpush1.bf16.msra.mxu0 0
      %544 = vmatprep.subr.bf16.mxu0 0
      %545 = vmatpush1.bf16.msra.mxu0 0
      %546 = vmatprep.subr.bf16.mxu0 0
      %547 = vmatpush1.bf16.msra.mxu0 0
      %548 = vmatprep.subr.bf16.mxu0 0
      %549 = vmatpush1.bf16.msra.mxu0 0
      %550 = vmatprep.subr.bf16.mxu0 0
      %551 = vmatpush1.bf16.msra.mxu0 0
      %552 = vmatprep.subr.bf16.mxu0 0
      %553 = vmatpush1.bf16.msra.mxu0 0
      %554 = vmatprep.subr.bf16.mxu0 0
      %555 = vmatpush1.bf16.msra.mxu0 0
      %556 = vmatprep.subr.bf16.mxu0 0
      %557 = vmatpush1.bf16.msra.mxu0 0
      %558 = vmatprep.subr.bf16.mxu0 0
      %559 = vmatpush1.bf16.msra.mxu0 0
      %560 = vmatprep.subr.bf16.mxu0 0
      %561 = vmatpush1.bf16.msra.mxu0 0
      %562 = vmatprep.subr.bf16.mxu0 0
      %563 = vmatpush1.bf16.msra.mxu0 0
      %564 = vmatprep.subr.bf16.mxu0 0
      %565 = vmatpush1.bf16.msra.mxu0 0
      %566 = vmatprep.subr.bf16.mxu0 0
      %567 = vmatpush1.bf16.msra.mxu0 0
      %568 = vmatprep.subr.bf16.mxu0 0
      %569 = vmatpush1.bf16.msra.mxu0 0
      %570 = vmatprep.mubr.bf16.mxu0 0
      %571 = vmatmul.mubr.bf16.gmra.mrb[0].mxu0 %v536
      %v572 = vpop.f32.mrb[0].mxu0
      %v573 = vadd.f32 %v518, %v572
      %v574 = vpop.f32.mrb[0].mxu0
      %v575 = vpop.f32.mrb[0].mxu0
      %v576 = vpop.f32.mrb[0].mxu0
      %577 = vdwg.mxu0
      %v578 = vld [vmem:[#allocation10 + $0x20] sm:$0xf]
      %v579 = vld [vmem:[#allocation10 + $0x24] sm:$0xf]
      %v580 = vld [vmem:[#allocation10 + $0x28] sm:$0xf]
      %v581 = vld [vmem:[#allocation10 + $0x2c] sm:$0xf]
      %v586 = vunpack.c.l.b16 %v578
      %v587 = vunpack.c.l.b16 %v579
      %v588 = vunpack.c.l.b16 %v580
      %v589 = vunpack.c.l.b16 %v581
      %v590 = vpack.c.b16 %v587, %v586
      %v591 = vpack.c.b16 %v589, %v588
      %v595 = vsel %vm192, %v459, 0
      %597 = vmatprep.subr.bf16.mxu0 0
      %598 = vmatpush1.bf16.msra.mxu0 %v590
      %599 = vmatprep.subr.bf16.mxu0 0
      %600 = vmatpush1.bf16.msra.mxu0 %v591
      %601 = vmatprep.subr.bf16.mxu0 0
      %602 = vmatpush1.bf16.msra.mxu0 0
      %603 = vmatprep.subr.bf16.mxu0 0
      %604 = vmatpush1.bf16.msra.mxu0 0
      %605 = vmatprep.subr.bf16.mxu0 0
      %606 = vmatpush1.bf16.msra.mxu0 0
      %607 = vmatprep.subr.bf16.mxu0 0
      %608 = vmatpush1.bf16.msra.mxu0 0
      %609 = vmatprep.subr.bf16.mxu0 0
      %610 = vmatpush1.bf16.msra.mxu0 0
      %611 = vmatprep.subr.bf16.mxu0 0
      %612 = vmatpush1.bf16.msra.mxu0 0
      %613 = vmatprep.subr.bf16.mxu0 0
      %614 = vmatpush1.bf16.msra.mxu0 0
      %615 = vmatprep.subr.bf16.mxu0 0
      %616 = vmatpush1.bf16.msra.mxu0 0
      %617 = vmatprep.subr.bf16.mxu0 0
      %618 = vmatpush1.bf16.msra.mxu0 0
      %619 = vmatprep.subr.bf16.mxu0 0
      %620 = vmatpush1.bf16.msra.mxu0 0
      %621 = vmatprep.subr.bf16.mxu0 0
      %622 = vmatpush1.bf16.msra.mxu0 0
      %623 = vmatprep.subr.bf16.mxu0 0
      %624 = vmatpush1.bf16.msra.mxu0 0
      %625 = vmatprep.subr.bf16.mxu0 0
      %626 = vmatpush1.bf16.msra.mxu0 0
      %627 = vmatprep.subr.bf16.mxu0 0
      %628 = vmatpush1.bf16.msra.mxu0 0
      %629 = vmatprep.mubr.bf16.mxu0 0
      %630 = vmatmul.mubr.bf16.gmra.mrb[0].mxu0 %v595
      %v631 = vpop.f32.mrb[0].mxu0
      %v632 = vadd.f32 0.0, %v631
      %v633 = vpop.f32.mrb[0].mxu0
      %v634 = vpop.f32.mrb[0].mxu0
      %v635 = vpop.f32.mrb[0].mxu0
      %636 = vdwg.mxu0
      %v637 = vadd.f32 %v573, %v632
      %v638 = vld [vmem:[%s5] sm:$0x1]
      %v640 = vlaneseq
      %v641 = vshrl.u32 %v640, 7
      %v642 = vsub.s32 0, %v641
      %v643 = vrot.slane %v638, %v642
      %v645 = vadd.f32 %v637, %v643
      %v646 = vtanh.pop %v645
      %v647 = vpack.c.bf16 %v646, %v646
      %v648 = vld [vmem:[#allocation12] sm:$0xf]
      %v649 = vld [vmem:[#allocation12 + $0x4] sm:$0xf]
      %v650 = vld [vmem:[#allocation12 + $0x8] sm:$0xf]
      %v651 = vld [vmem:[#allocation12 + $0xc] sm:$0xf]
      %v652 = vld [vmem:[#allocation12 + $0x10] sm:$0xf]
      %v653 = vld [vmem:[#allocation12 + $0x14] sm:$0xf]
      %v654 = vld [vmem:[#allocation12 + $0x18] sm:$0xf]
      %v655 = vld [vmem:[#allocation12 + $0x1c] sm:$0xf]
      %v656 = vld [vmem:[#allocation12 + $0x20] sm:$0xf]
      %v657 = vld [vmem:[#allocation12 + $0x24] sm:$0xf]
      %v658 = vld [vmem:[#allocation12 + $0x28] sm:$0xf]
      %v659 = vld [vmem:[#allocation12 + $0x2c] sm:$0xf]
      %v660 = vld [vmem:[%s7] sm:$0x1]
      %v662 = vlaneseq
      %v663 = vshrl.u32 %v662, 7
      %v664 = vsub.s32 0, %v663
      %v665 = vrot.slane %v660, %v664
      %v679 = vunpack.c.l.b16 %v648
      %v680 = vunpack.c.l.b16 %v649
      %v681 = vunpack.c.l.b16 %v650
      %v682 = vunpack.c.l.b16 %v651
      %v683 = vunpack.c.l.b16 %v652
      %v684 = vunpack.c.l.b16 %v653
      %v685 = vunpack.c.l.b16 %v654
      %v686 = vunpack.c.l.b16 %v655
      %v687 = vunpack.c.l.b16 %v656
      %v688 = vunpack.c.l.b16 %v657
      %v689 = vunpack.c.l.b16 %v658
      %v690 = vunpack.c.l.b16 %v659
      %v691 = vpack.c.b16 %v680, %v679
      %v692 = vpack.c.b16 %v682, %v681
      %v693 = vpack.c.b16 %v684, %v683
      %v694 = vpack.c.b16 %v686, %v685
      %v695 = vpack.c.b16 %v688, %v687
      %v696 = vpack.c.b16 %v690, %v689
      %vm703 = vcmask 785408
      %v705 = vsel %vm703, %v647, 0
      %707 = vmatprep.subr.bf16.mxu0 0
      %708 = vmatpush1.bf16.msra.mxu0 %v691
      %709 = vmatprep.subr.bf16.mxu0 0
      %710 = vmatpush1.bf16.msra.mxu0 %v692
      %711 = vmatprep.subr.bf16.mxu0 0
      %712 = vmatpush1.bf16.msra.mxu0 %v693
      %713 = vmatprep.subr.bf16.mxu0 0
      %714 = vmatpush1.bf16.msra.mxu0 %v694
      %715 = vmatprep.subr.bf16.mxu0 0
      %716 = vmatpush1.bf16.msra.mxu0 %v695
      %717 = vmatprep.subr.bf16.mxu0 0
      %718 = vmatpush1.bf16.msra.mxu0 %v696
      %719 = vmatprep.subr.bf16.mxu0 0
      %720 = vmatpush1.bf16.msra.mxu0 0
      %721 = vmatprep.subr.bf16.mxu0 0
      %722 = vmatpush1.bf16.msra.mxu0 0
      %723 = vmatprep.subr.bf16.mxu0 0
      %724 = vmatpush1.bf16.msra.mxu0 0
      %725 = vmatprep.subr.bf16.mxu0 0
      %726 = vmatpush1.bf16.msra.mxu0 0
      %727 = vmatprep.subr.bf16.mxu0 0
      %728 = vmatpush1.bf16.msra.mxu0 0
      %729 = vmatprep.subr.bf16.mxu0 0
      %730 = vmatpush1.bf16.msra.mxu0 0
      %731 = vmatprep.subr.bf16.mxu0 0
      %732 = vmatpush1.bf16.msra.mxu0 0
      %733 = vmatprep.subr.bf16.mxu0 0
      %734 = vmatpush1.bf16.msra.mxu0 0
      %735 = vmatprep.subr.bf16.mxu0 0
      %736 = vmatpush1.bf16.msra.mxu0 0
      %737 = vmatprep.subr.bf16.mxu0 0
      %738 = vmatpush1.bf16.msra.mxu0 0
      %739 = vmatprep.mubr.bf16.mxu0 0
      %740 = vmatmul.mubr.bf16.gmra.mrb[0].mxu0 %v705
      %v741 = vpop.f32.mrb[0].mxu0
      %v742 = vadd.f32 %v665, %v741
      %v743 = vpop.f32.mrb[0].mxu0
      %v744 = vpop.f32.mrb[0].mxu0
      %v745 = vpop.f32.mrb[0].mxu0
      %746 = vdwg.mxu0
      %747 = vst [vmem:[#allocation13] sm:$0xff] %v742
    $region61: #{tpu_custom_call.1} parent=1 // pred_fallthru
      _
    // Predicated region
    $region62: #{tpu_custom_call.1} parent=1 // pred_check
      _
    $region63: #{tpu_custom_call.1} parent=1 // pred_check_branch
      %749 = sbr.rel (0) target = $region65
    $region64: #{tpu_custom_call.1} parent=1 // pred_region
      %s751 = ssub.s32 128, 128
      %752 = vsyncadd [#allocation6], %s751
      %s754 = sshll.u32 [#allocation13], 4
      %s755 = int_to_ptr.vmem [resolvable:$true] %s754
      %757 = dma.vmem_to_hbm [thread:$0]  %s755, 128, %s8, [#allocation6]
    $region65: #{tpu_custom_call.1} parent=1 // pred_fallthru
      _
    // Predicated region
    $region66: #{tpu_custom_call.1} parent=1 // pred_check
      _
    $region67: #{tpu_custom_call.1} parent=1 // pred_check_branch
      %759 = sbr.rel (0) target = $region69
    $region68: #{tpu_custom_call.1} parent=1 // pred_region
      %760 = dma.done [#allocation6], 128
    $region69: #{tpu_custom_call.1} parent=1 // pred_fallthru
      _
    %761 = vsyncpa [#allocation5], 1
    %762 = vsyncpa [#allocation8], 1
    %763 = vsyncpa [#allocation11], 1
    %764 = vsyncpa [#allocation6], 1

</llo_original>
